<compile_context>
chip_gen: v7x
topology: tpu7x:2x2x1
jax: 0.10.0
libtpu: 0.0.40
codegen_flags: <defaults>
</compile_context>

<pallas_src>
import jax
import jax.numpy as jnp
from jax.experimental import pallas as pl
from jax.experimental.pallas import tpu as pltpu

HIDDEN = 256
DEFAULT_TILE_B = 4096  # big tile to amortize ~0.35 us/step pipeline overhead


def _critic_kernel(s_ref, a_ref, w1s_ref, w1a_ref, b1_ref, w2_ref, b2_ref, o_ref):
    # ---- layer 1: fused "concat" as a split matmul on the MXU ----
    s = s_ref[...].astype(jnp.bfloat16)   # no-op if inputs already bf16
    a = a_ref[...].astype(jnp.bfloat16)
    h = jnp.dot(s, w1s_ref[...], preferred_element_type=jnp.float32)
    h = h + jnp.dot(a, w1a_ref[...], preferred_element_type=jnp.float32)
    # bias + ReLU in f32 on the VPU (v5e-friendly; no bf16 elementwise)
    h = jnp.maximum(h + b1_ref[...], 0.0)
    # ---- layer 2: bf16 MXU inputs, f32 accumulate ----
    q = jnp.dot(h.astype(jnp.bfloat16), w2_ref[...],
                preferred_element_type=jnp.float32)
    q = jnp.maximum(q + b2_ref[...], 0.0)
    o_ref[...] = q.astype(o_ref.dtype)


def _choose_tile_b(B, tile_b):
    """Fixed tile (multiple of 8); small batches collapse to one full block."""
    if tile_b is None:
        tile_b = DEFAULT_TILE_B
    if B <= tile_b:
        return B                      # single full-array block (any B)
    return max(8, (tile_b // 8) * 8)  # keep sublane alignment


def acs_critic_forward(state, action, params, *, tile_b=None,
                       out_dtype=jnp.float32):
    """state: (B, state_dim), action: (B, action_dim). Returns (B, 256)."""
    w1s, w1a = params["w1s"], params["w1a"]
    b1, w2, b2 = params["b1"], params["w2"], params["b2"]

    B, sdim = state.shape
    _, adim = action.shape
    D = sdim + adim

    tile_b = _choose_tile_b(B, tile_b)
    num_tiles = pl.cdiv(B, tile_b)   # ragged last block handled by Pallas

    # ---- explicit VMEM budget for this tile (covers all three generations) --
    in_item = max(state.dtype.itemsize, action.dtype.itemsize)
    out_item = jnp.dtype(out_dtype).itemsize
    weight_bytes = (w1s.size * w1s.dtype.itemsize + w1a.size * w1a.dtype.itemsize
                    + w2.size * w2.dtype.itemsize
                    + b1.size * b1.dtype.itemsize + b2.size * b2.dtype.itemsize)
    io_bytes = 2 * tile_b * D * in_item + 2 * tile_b * HIDDEN * out_item  # dbl-buffered
    interm_bytes = tile_b * HIDDEN * (4 + 2 + 4)  # h f32, h bf16, q f32
    vmem_need = 2 * weight_bytes + io_bytes + interm_bytes
    vmem_limit = int(min(max(int(vmem_need * 1.5) + (2 << 20), 16 << 20), 48 << 20))

    # Advisory cost hint: 2 matmuls + elementwise epilogues.
    flops = 2 * B * D * HIDDEN + 2 * B * HIDDEN * HIDDEN
    bytes_accessed = (state.size * state.dtype.itemsize
                      + action.size * action.dtype.itemsize
                      + weight_bytes
                      + B * HIDDEN * out_item)
    cost = pl.CostEstimate(flops=flops, transcendentals=0,
                           bytes_accessed=bytes_accessed)

    compiler_params = pltpu.CompilerParams(
        dimension_semantics=("parallel",),   # megacore / v7x 2-TC sharding
        vmem_limit_bytes=vmem_limit,
    )

    return pl.pallas_call(
        _critic_kernel,
        out_shape=jax.ShapeDtypeStruct((B, HIDDEN), out_dtype),
        grid=(num_tiles,),
        in_specs=[
            pl.BlockSpec((tile_b, sdim), lambda i: (i, 0)),       # state tile
            pl.BlockSpec((tile_b, adim), lambda i: (i, 0)),       # action tile
            pl.BlockSpec((sdim, HIDDEN), lambda i: (0, 0)),       # w1s (resident)
            pl.BlockSpec((adim, HIDDEN), lambda i: (0, 0)),       # w1a (resident)
            pl.BlockSpec((1, HIDDEN), lambda i: (0, 0)),          # b1  (resident)
            pl.BlockSpec((HIDDEN, HIDDEN), lambda i: (0, 0)),     # w2  (resident)
            pl.BlockSpec((1, HIDDEN), lambda i: (0, 0)),          # b2  (resident)
        ],
        out_specs=pl.BlockSpec((tile_b, HIDDEN), lambda i: (i, 0)),
        compiler_params=compiler_params,
        cost_estimate=cost,
    )(state, action, w1s, w1a, b1, w2, b2)


def init_params(key, state_dim, action_dim):
    """Deterministic synthetic init matching nn.Linear shapes.

    PyTorch stores Linear weight as (out, in); we store the transpose
    (in, out), split w1 into state/action halves, and keep matmul weights
    in bf16 (biases in f32).
    """
    d_in = state_dim + action_dim
    k1, k2, k3, k4 = jax.random.split(key, 4)
    lim1 = 1.0 / jnp.sqrt(d_in)
    lim2 = 1.0 / jnp.sqrt(HIDDEN)
    w1 = jax.random.uniform(k1, (d_in, HIDDEN), jnp.float32, -lim1, lim1)
    return {
        "w1s": w1[:state_dim].astype(jnp.bfloat16),
        "w1a": w1[state_dim:].astype(jnp.bfloat16),
        "b1": jax.random.uniform(k2, (1, HIDDEN), jnp.float32, -lim1, lim1),
        "w2": jax.random.uniform(k3, (HIDDEN, HIDDEN), jnp.float32,
                                 -lim2, lim2).astype(jnp.bfloat16),
        "b2": jax.random.uniform(k4, (1, HIDDEN), jnp.float32, -lim2, lim2),
    }


def _reference_bf16(state, action, params):
    """Same math as the kernel (bf16 MXU inputs, f32 accumulate)."""
    s = state.astype(jnp.bfloat16)
    a = action.astype(jnp.bfloat16)
    h = (jnp.dot(s, params["w1s"], preferred_element_type=jnp.float32)
         + jnp.dot(a, params["w1a"], preferred_element_type=jnp.float32))
    h = jnp.maximum(h + params["b1"], 0.0)
    q = jnp.dot(h.astype(jnp.bfloat16), params["w2"],
                preferred_element_type=jnp.float32)
    return jnp.maximum(q + params["b2"], 0.0)


def _reference_f32(state, action, params):
    """Full-precision reference of the original PyTorch forward."""
    w1 = jnp.concatenate([params["w1s"], params["w1a"]], axis=0).astype(jnp.float32)
    sa = jnp.concatenate([state, action], axis=1)
    h = jnp.maximum(sa @ w1 + params["b1"], 0.0)
    return jnp.maximum(h @ params["w2"].astype(jnp.float32) + params["b2"], 0.0)


if __name__ == "__main__":
    key = jax.random.PRNGKey(0)
    kp, ks, ka, ks2, ka2 = jax.random.split(key, 5)

    state_dim, action_dim = 24, 8   # D = 32

    params = init_params(kp, state_dim, action_dim)

    # ---- test 1: small batch, single full-array block ----
    batch = 8
    state = jax.random.normal(ks, (batch, state_dim), jnp.float32)
    action = jax.random.normal(ka, (batch, action_dim), jnp.float32)

    out = acs_critic_forward(state, action, params)
    out = jax.block_until_ready(out)
    assert out.shape == (batch, HIDDEN)

    ref_bf16 = _reference_bf16(state, action, params)
    assert jnp.allclose(out, ref_bf16, atol=1e-3, rtol=1e-3)

    ref_f32 = _reference_f32(state, action, params)
    assert jnp.allclose(out, ref_f32, atol=5e-2, rtol=5e-2)

    # ---- test 2: tiled grid with a ragged last block (cdiv path) ----
    batch2 = 40                       # tile_b=16 -> grid=3, last block padded
    state2 = jax.random.normal(ks2, (batch2, state_dim), jnp.float32)
    action2 = jax.random.normal(ka2, (batch2, action_dim), jnp.float32)

    out2 = acs_critic_forward(state2, action2, params, tile_b=16)
    out2 = jax.block_until_ready(out2)
    assert out2.shape == (batch2, HIDDEN)
    ref2 = _reference_bf16(state2, action2, params)
    assert jnp.allclose(out2, ref2, atol=1e-3, rtol=1e-3)

    # ---- test 3: bf16 output path (halves dominant HBM stream) ----
    out3 = acs_critic_forward(state2, action2, params, tile_b=16,
                              out_dtype=jnp.bfloat16)
    out3 = jax.block_until_ready(out3)
    assert out3.dtype == jnp.bfloat16
    assert jnp.allclose(out3.astype(jnp.float32), ref2, atol=3e-2, rtol=3e-2)

    print("KERNEL_OK")
</pallas_src>

<mosaic_0001>
module attributes {stable_mosaic.version = 11 : i64} {
  func.func @_critic_kernel(%arg0: i32, %arg1: memref<8x24xf32, #tpu.memory_space<vmem>>, %arg2: memref<8x8xf32, #tpu.memory_space<vmem>>, %arg3: memref<24x256xbf16, #tpu.memory_space<vmem>>, %arg4: memref<8x256xbf16, #tpu.memory_space<vmem>>, %arg5: memref<1x256xf32, #tpu.memory_space<vmem>>, %arg6: memref<256x256xbf16, #tpu.memory_space<vmem>>, %arg7: memref<1x256xf32, #tpu.memory_space<vmem>>, %arg8: memref<8x256xf32, #tpu.memory_space<vmem>>) attributes {dimension_semantics = [#tpu.dimension_semantics<parallel>], iteration_bounds = array<i64: 1>, scalar_prefetch = 0 : i64, scratch_operands = 0 : i64, tpu.core_type = #tpu.core_type<tc>, window_params = [{transform_indices = @transform_0, window_bounds = array<i64: 8, 24>}, {transform_indices = @transform_1, window_bounds = array<i64: 8, 8>}, {pipeline_mode = #tpu.pipeline_mode<synchronous>, transform_indices = @transform_2, window_bounds = array<i64: 24, 256>}, {pipeline_mode = #tpu.pipeline_mode<synchronous>, transform_indices = @transform_3, window_bounds = array<i64: 8, 256>}, {pipeline_mode = #tpu.pipeline_mode<synchronous>, transform_indices = @transform_4, window_bounds = array<i64: 1, 256>}, {pipeline_mode = #tpu.pipeline_mode<synchronous>, transform_indices = @transform_5, window_bounds = array<i64: 256, 256>}, {pipeline_mode = #tpu.pipeline_mode<synchronous>, transform_indices = @transform_6, window_bounds = array<i64: 1, 256>}, {transform_indices = @transform_7, window_bounds = array<i64: 8, 256>}]} {
    %c0 = arith.constant 0 : index
    %c0_0 = arith.constant 0 : index
    %0 = vector.load %arg1[%c0, %c0_0] : memref<8x24xf32, #tpu.memory_space<vmem>>, vector<8x24xf32>
    %1 = arith.truncf %0 : vector<8x24xf32> to vector<8x24xbf16>
    %c0_1 = arith.constant 0 : index
    %c0_2 = arith.constant 0 : index
    %2 = vector.load %arg2[%c0_1, %c0_2] : memref<8x8xf32, #tpu.memory_space<vmem>>, vector<8x8xf32>
    %3 = arith.truncf %2 : vector<8x8xf32> to vector<8x8xbf16>
    %c0_3 = arith.constant 0 : index
    %c0_4 = arith.constant 0 : index
    %4 = vector.load %arg3[%c0_3, %c0_4] : memref<24x256xbf16, #tpu.memory_space<vmem>>, vector<24x256xbf16>
    %cst = arith.constant dense<0.000000e+00> : vector<8x256xf32>
    %5 = tpu.matmul %1, %4, %cst {dimension_numbers = #tpu.dot_dimension_numbers<[1], [0], [0], [1], [0, 0, 1, 1], [], []>} : vector<8x24xbf16>, vector<24x256xbf16>, vector<8x256xf32> -> vector<8x256xf32>
    %c0_5 = arith.constant 0 : index
    %c0_6 = arith.constant 0 : index
    %6 = vector.load %arg4[%c0_5, %c0_6] : memref<8x256xbf16, #tpu.memory_space<vmem>>, vector<8x256xbf16>
    %cst_7 = arith.constant dense<0.000000e+00> : vector<8x256xf32>
    %7 = tpu.matmul %3, %6, %cst_7 {dimension_numbers = #tpu.dot_dimension_numbers<[1], [0], [0], [1], [0, 0, 1, 1], [], []>} : vector<8x8xbf16>, vector<8x256xbf16>, vector<8x256xf32> -> vector<8x256xf32>
    %8 = arith.addf %5, %7 : vector<8x256xf32>
    %c0_8 = arith.constant 0 : index
    %c0_9 = arith.constant 0 : index
    %9 = vector.load %arg5[%c0_8, %c0_9] : memref<1x256xf32, #tpu.memory_space<vmem>>, vector<1x256xf32>
    %10 = vector.broadcast %9 : vector<1x256xf32> to vector<8x256xf32>
    %11 = arith.addf %8, %10 : vector<8x256xf32>
    %cst_10 = arith.constant 0.000000e+00 : f32
    %12 = vector.broadcast %cst_10 : f32 to vector<8x256xf32>
    %13 = arith.maximumf %11, %12 : vector<8x256xf32>
    %14 = arith.truncf %13 : vector<8x256xf32> to vector<8x256xbf16>
    %c0_11 = arith.constant 0 : index
    %c0_12 = arith.constant 0 : index
    %15 = vector.load %arg6[%c0_11, %c0_12] : memref<256x256xbf16, #tpu.memory_space<vmem>>, vector<256x256xbf16>
    %cst_13 = arith.constant dense<0.000000e+00> : vector<8x256xf32>
    %16 = tpu.matmul %14, %15, %cst_13 {dimension_numbers = #tpu.dot_dimension_numbers<[1], [0], [0], [1], [0, 0, 1, 1], [], []>} : vector<8x256xbf16>, vector<256x256xbf16>, vector<8x256xf32> -> vector<8x256xf32>
    %c0_14 = arith.constant 0 : index
    %c0_15 = arith.constant 0 : index
    %17 = vector.load %arg7[%c0_14, %c0_15] : memref<1x256xf32, #tpu.memory_space<vmem>>, vector<1x256xf32>
    %18 = vector.broadcast %17 : vector<1x256xf32> to vector<8x256xf32>
    %19 = arith.addf %16, %18 : vector<8x256xf32>
    %cst_16 = arith.constant 0.000000e+00 : f32
    %20 = vector.broadcast %cst_16 : f32 to vector<8x256xf32>
    %21 = arith.maximumf %19, %20 : vector<8x256xf32>
    %c0_17 = arith.constant 0 : index
    %c0_18 = arith.constant 0 : index
    %22 = vector.load %arg8[%c0_17, %c0_18] : memref<8x256xf32, #tpu.memory_space<vmem>>, vector<8x256xf32>
    tpu.vector_store %arg8[%c0_17, %c0_18], %21 {strides = array<i32>} : memref<8x256xf32, #tpu.memory_space<vmem>>, vector<8x256xf32>,
    return
  }
  func.func @transform_0(%arg0: i32) -> (i32, i32) {
    %c0_i32 = arith.constant 0 : i32
    %c0_i32_0 = arith.constant 0 : i32
    return %arg0, %c0_i32 : i32, i32
  }
  func.func @transform_1(%arg0: i32) -> (i32, i32) {
    %c0_i32 = arith.constant 0 : i32
    %c0_i32_0 = arith.constant 0 : i32
    return %arg0, %c0_i32 : i32, i32
  }
  func.func @transform_2(%arg0: i32) -> (i32, i32) {
    %c0_i32 = arith.constant 0 : i32
    %c0_i32_0 = arith.constant 0 : i32
    %c0_i32_1 = arith.constant 0 : i32
    return %c0_i32, %c0_i32_0 : i32, i32
  }
  func.func @transform_3(%arg0: i32) -> (i32, i32) {
    %c0_i32 = arith.constant 0 : i32
    %c0_i32_0 = arith.constant 0 : i32
    %c0_i32_1 = arith.constant 0 : i32
    return %c0_i32, %c0_i32_0 : i32, i32
  }
  func.func @transform_4(%arg0: i32) -> (i32, i32) {
    %c0_i32 = arith.constant 0 : i32
    %c0_i32_0 = arith.constant 0 : i32
    %c0_i32_1 = arith.constant 0 : i32
    return %c0_i32, %c0_i32_0 : i32, i32
  }
  func.func @transform_5(%arg0: i32) -> (i32, i32) {
    %c0_i32 = arith.constant 0 : i32
    %c0_i32_0 = arith.constant 0 : i32
    %c0_i32_1 = arith.constant 0 : i32
    return %c0_i32, %c0_i32_0 : i32, i32
  }
  func.func @transform_6(%arg0: i32) -> (i32, i32) {
    %c0_i32 = arith.constant 0 : i32
    %c0_i32_0 = arith.constant 0 : i32
    %c0_i32_1 = arith.constant 0 : i32
    return %c0_i32, %c0_i32_0 : i32, i32
  }
  func.func @transform_7(%arg0: i32) -> (i32, i32) {
    %c0_i32 = arith.constant 0 : i32
    %c0_i32_0 = arith.constant 0 : i32
    return %arg0, %c0_i32 : i32, i32
  }
}

</mosaic_0001>

<llo_original>
// kernel: tpu_custom_call.1
$region0: #{tpu_custom_call.1}
  #allocation0 [shape = 'u32[]', space=smem, size = 0x4, offset = 0x4, fixed_abs, tag = 'smem constant byte address 0x4 - core index']
  #allocation1 [shape = 'u32[144,128]{1,0:T(1,128)}', space=vmem, size = 0x12000, scoped, tag = 'internal scratch']
  %s0 = inlined_call_operand.hbm [shape: f32[8,24], index: 0, kind: input, shape index: {}]
  %s1 = inlined_call_operand.hbm [shape: f32[8,8], index: 1, kind: input, shape index: {}]
  %s2 = inlined_call_operand.hbm [shape: bf16[24,256], index: 2, kind: input, shape index: {}]
  %s3 = inlined_call_operand.vmem [shape: bf16[8,256], index: 3, kind: input, shape index: {}]
  %s4 = inlined_call_operand.vmem [shape: f32[1,256], index: 4, kind: input, shape index: {}]
  %s5 = inlined_call_operand.hbm [shape: bf16[256,256], index: 5, kind: input, shape index: {}]
  %s6 = inlined_call_operand.vmem [shape: f32[1,256], index: 6, kind: input, shape index: {}]
  %s7 = inlined_call_operand.hbm [shape: f32[8,256], index: 7, kind: output, shape index: {}]
  %s8 = sld [smem:[#allocation0]]
  $region54: #{tpu_custom_call.1} parent=0
    _
  %s10 = ssub.s32 1, %s8
  %s11 = scalar_select 0, %s10, %s8
  $region1: #{tpu_custom_call.1} parent=0
    #allocation2 [shape = 'u8[4096]{0}', space=vmem, size = 0x1000, scoped, tag = 'input window, operand 0, single buffered']
    #allocation3 [shape = 's32[1]{0}', space=sflag, size = 0x4, scoped, tag = 'scoped memory for tpu_custom_call.1']
    #allocation4 [shape = 's32[1]{0}', space=sflag, size = 0x4, scoped, tag = 'scoped memory for tpu_custom_call.1']
    #allocation5 [shape = 'u8[4096]{0}', space=vmem, size = 0x1000, scoped, tag = 'input window, operand 1, single buffered']
    #allocation6 [shape = 's32[1]{0}', space=sflag, size = 0x4, scoped, tag = 'scoped memory for tpu_custom_call.1']
    #allocation7 [shape = 'u8[12288]{0}', space=vmem, size = 0x3000, scoped, tag = 'input window, operand 2, single buffered']
    #allocation8 [shape = 'u8[131072]{0}', space=vmem, size = 0x20000, scoped, tag = 'input window, operand 5, single buffered']
    #allocation9 [shape = 's32[1]{0}', space=sflag, size = 0x4, scoped, tag = 'scoped memory for tpu_custom_call.1']
    #allocation10 [shape = 'u8[8192]{0}', space=vmem, size = 0x2000, scoped, tag = 'output window, operand 0, single buffered']
    %12 = vsyncpa [#allocation3], 0
    %13 = vsyncpa [#allocation6], 0
    %14 = vsyncpa [#allocation9], 0
    %15 = vsyncpa [#allocation4], 0
    // Predicated region
    $region2: #{tpu_custom_call.1} parent=1 // pred_check
      _
    $region3: #{tpu_custom_call.1} parent=1 // pred_check_branch
      %17 = sbr.rel (0) target = $region5
    $region4: #{tpu_custom_call.1} parent=1 // pred_region
      %s19 = ssub.s32 128, 128
      %20 = vsyncadd [#allocation3], %s19
      %s22 = sshll.u32 [#allocation2], 4
      %s23 = int_to_ptr.vmem [resolvable:$true] %s22
      %25 = dma.hbm_to_vmem [thread:$0]  %s0, 128, %s23, [#allocation3]
    $region5: #{tpu_custom_call.1} parent=1 // pred_fallthru
      _
    // Predicated region
    $region6: #{tpu_custom_call.1} parent=1 // pred_check
      _
    $region7: #{tpu_custom_call.1} parent=1 // pred_check_branch
      %27 = sbr.rel (0) target = $region9
    $region8: #{tpu_custom_call.1} parent=1 // pred_region
      %s29 = ssub.s32 128, 128
      %30 = vsyncadd [#allocation6], %s29
      %s32 = sshll.u32 [#allocation5], 4
      %s33 = int_to_ptr.vmem [resolvable:$true] %s32
      %35 = dma.hbm_to_vmem [thread:$0]  %s1, 128, %s33, [#allocation6]
    $region9: #{tpu_custom_call.1} parent=1 // pred_fallthru
      _
    // Predicated region
    $region10: #{tpu_custom_call.1} parent=1 // pred_check
      _
    $region11: #{tpu_custom_call.1} parent=1 // pred_check_branch
      %37 = sbr.rel (0) target = $region13
    $region12: #{tpu_custom_call.1} parent=1 // pred_region
      %s39 = ssub.s32 384, 384
      %40 = vsyncadd [#allocation6], %s39
      %s41 = sshll.u32 [#allocation7], 4
      %s42 = int_to_ptr.vmem [resolvable:$true] %s41
      %47 = dma.hbm_to_vmem [thread:$0]  %s2, 384, %s42, [#allocation6], 128, 128, 8
    $region13: #{tpu_custom_call.1} parent=1 // pred_fallthru
      _
    // Predicated region
    $region14: #{tpu_custom_call.1} parent=1 // pred_check
      _
    $region15: #{tpu_custom_call.1} parent=1 // pred_check_branch
      %49 = sbr.rel (0) target = $region17
    $region16: #{tpu_custom_call.1} parent=1 // pred_region
      _
    $region17: #{tpu_custom_call.1} parent=1 // pred_fallthru
      _
    // Predicated region
    $region18: #{tpu_custom_call.1} parent=1 // pred_check
      _
    $region19: #{tpu_custom_call.1} parent=1 // pred_check_branch
      %51 = sbr.rel (0) target = $region21
    $region20: #{tpu_custom_call.1} parent=1 // pred_region
      _
    $region21: #{tpu_custom_call.1} parent=1 // pred_fallthru
      _
    // Predicated region
    $region22: #{tpu_custom_call.1} parent=1 // pred_check
      _
    $region23: #{tpu_custom_call.1} parent=1 // pred_check_branch
      %53 = sbr.rel (0) target = $region25
    $region24: #{tpu_custom_call.1} parent=1 // pred_region
      %s55 = ssub.s32 4096, 4096
      %56 = vsyncadd [#allocation9], %s55
      %s57 = sshll.u32 [#allocation8], 4
      %s58 = int_to_ptr.vmem [resolvable:$true] %s57
      %63 = dma.hbm_to_vmem [thread:$0]  %s5, 4096, %s58, [#allocation9], 128, 128, 8
    $region25: #{tpu_custom_call.1} parent=1 // pred_fallthru
      _
    // Predicated region
    $region26: #{tpu_custom_call.1} parent=1 // pred_check
      _
    $region27: #{tpu_custom_call.1} parent=1 // pred_check_branch
      %65 = sbr.rel (0) target = $region29
    $region28: #{tpu_custom_call.1} parent=1 // pred_region
      _
    $region29: #{tpu_custom_call.1} parent=1 // pred_fallthru
      _
    // Predicated region
    $region30: #{tpu_custom_call.1} parent=1 // pred_check
      _
    $region31: #{tpu_custom_call.1} parent=1 // pred_check_branch
      %67 = sbr.rel (0) target = $region33
    $region32: #{tpu_custom_call.1} parent=1 // pred_region
      %68 = dma.done [#allocation3], 128
    $region33: #{tpu_custom_call.1} parent=1 // pred_fallthru
      _
    // Predicated region
    $region34: #{tpu_custom_call.1} parent=1 // pred_check
      _
    $region35: #{tpu_custom_call.1} parent=1 // pred_check_branch
      %70 = sbr.rel (0) target = $region37
    $region36: #{tpu_custom_call.1} parent=1 // pred_region
      %71 = dma.done [#allocation6], 128
    $region37: #{tpu_custom_call.1} parent=1 // pred_fallthru
      _
    // Predicated region
    $region38: #{tpu_custom_call.1} parent=1 // pred_check
      _
    $region39: #{tpu_custom_call.1} parent=1 // pred_check_branch
      %73 = sbr.rel (0) target = $region41
    $region40: #{tpu_custom_call.1} parent=1 // pred_region
      %74 = dma.done [#allocation6], 384
    $region41: #{tpu_custom_call.1} parent=1 // pred_fallthru
      _
    // Predicated region
    $region42: #{tpu_custom_call.1} parent=1 // pred_check
      _
    $region43: #{tpu_custom_call.1} parent=1 // pred_check_branch
      %76 = sbr.rel (0) target = $region45
    $region44: #{tpu_custom_call.1} parent=1 // pred_region
      %77 = dma.done [#allocation9], 4096
    $region45: #{tpu_custom_call.1} parent=1 // pred_fallthru
      _
    %v79 = vld [vmem:[#allocation2] sm:$0xff]
    %v80 = vpack.c.bf16 %v79, %v79
    %v81 = vld [vmem:[#allocation5] sm:$0xff]
    %v82 = vpack.c.bf16 %v81, %v81
    %v83 = vld [vmem:[#allocation7] sm:$0xff]
    %v84 = vld [vmem:[#allocation7 + $0x8] sm:$0xff]
    %v85 = vld [vmem:[#allocation7 + $0x10] sm:$0xff]
    %v86 = vld [vmem:[%s3] sm:$0xff]
    %v88 = vunpack.c.l.b16 %v86
    %v89 = vunpack.c.h.b16 %v86
    %v90 = vpack.c.b16 %v88, %v88
    %v91 = vpack.c.b16 %v89, %v89
    %vm92 = vcmask 64512
    %v94 = vsel %vm92, %v82, 0
    %vm96 = vcmask 1043456
    %v98 = vsel %vm96, %v90, 0
    %v101 = vsel %vm96, %v91, 0
    %103 = vmatprep.subr.bf16.mxu0 %v101
    %104 = vmatpush1.bf16.msra.mxu0 %v98
    %105 = vmatprep.subr.bf16.mxu0 0
    %106 = vmatpush1.bf16.msra.mxu0 0
    %107 = vmatprep.subr.bf16.mxu0 0
    %108 = vmatpush1.bf16.msra.mxu0 0
    %109 = vmatprep.subr.bf16.mxu0 0
    %110 = vmatpush1.bf16.msra.mxu0 0
    %111 = vmatprep.subr.bf16.mxu0 0
    %112 = vmatpush1.bf16.msra.mxu0 0
    %113 = vmatprep.subr.bf16.mxu0 0
    %114 = vmatpush1.bf16.msra.mxu0 0
    %115 = vmatprep.subr.bf16.mxu0 0
    %116 = vmatpush1.bf16.msra.mxu0 0
    %117 = vmatprep.subr.bf16.mxu0 0
    %118 = vmatpush1.bf16.msra.mxu0 0
    %119 = vmatprep.subr.bf16.mxu0 0
    %120 = vmatpush1.bf16.msra.mxu0 0
    %121 = vmatprep.subr.bf16.mxu0 0
    %122 = vmatpush1.bf16.msra.mxu0 0
    %123 = vmatprep.subr.bf16.mxu0 0
    %124 = vmatpush1.bf16.msra.mxu0 0
    %125 = vmatprep.subr.bf16.mxu0 0
    %126 = vmatpush1.bf16.msra.mxu0 0
    %127 = vmatprep.subr.bf16.mxu0 0
    %128 = vmatpush1.bf16.msra.mxu0 0
    %129 = vmatprep.subr.bf16.mxu0 0
    %130 = vmatpush1.bf16.msra.mxu0 0
    %131 = vmatprep.subr.bf16.mxu0 0
    %132 = vmatpush1.bf16.msra.mxu0 0
    %133 = vmatprep.subr.bf16.mxu0 0
    %134 = vmatpush1.bf16.msra.mxu0 0
    %135 = vmatprep.mubr.bf16.mxu0 0
    %136 = vmatmul.mubr.bf16.gmra.mrb[0].mxu0 %v94
    %v137 = vpop.f32.mrb[0].mxu0
    %v138 = vadd.f32 0.0, %v137
    %v139 = vpop.f32.mrb[0].mxu0
    %v140 = vadd.f32 0.0, %v139
    %v141 = vpop.f32.mrb[0].mxu0
    %v142 = vpop.f32.mrb[0].mxu0
    %143 = vdwg.mxu0
    %v147 = vunpack.c.l.b16 %v83
    %v148 = vunpack.c.h.b16 %v83
    %v149 = vunpack.c.l.b16 %v84
    %v150 = vunpack.c.h.b16 %v84
    %v151 = vunpack.c.l.b16 %v85
    %v152 = vunpack.c.h.b16 %v85
    %v153 = vpack.c.b16 %v149, %v147
    %v154 = vpack.c.b16 %v150, %v148
    %v155 = vpack.c.b16 %v151, %v151
    %v156 = vpack.c.b16 %v152, %v152
    %vm159 = vcmask 195584
    %v161 = vsel %vm159, %v80, 0
    %v164 = vsel %vm96, %v155, 0
    %v167 = vsel %vm96, %v156, 0
    %169 = vmatprep.subr.bf16.mxu0 %v154
    %170 = vmatpush1.bf16.msra.mxu0 %v153
    %171 = vmatprep.subr.bf16.mxu0 %v167
    %172 = vmatpush1.bf16.msra.mxu0 %v164
    %173 = vmatprep.subr.bf16.mxu0 0
    %174 = vmatpush1.bf16.msra.mxu0 0
    %175 = vmatprep.subr.bf16.mxu0 0
    %176 = vmatpush1.bf16.msra.mxu0 0
    %177 = vmatprep.subr.bf16.mxu0 0
    %178 = vmatpush1.bf16.msra.mxu0 0
    %179 = vmatprep.subr.bf16.mxu0 0
    %180 = vmatpush1.bf16.msra.mxu0 0
    %181 = vmatprep.subr.bf16.mxu0 0
    %182 = vmatpush1.bf16.msra.mxu0 0
    %183 = vmatprep.subr.bf16.mxu0 0
    %184 = vmatpush1.bf16.msra.mxu0 0
    %185 = vmatprep.subr.bf16.mxu0 0
    %186 = vmatpush1.bf16.msra.mxu0 0
    %187 = vmatprep.subr.bf16.mxu0 0
    %188 = vmatpush1.bf16.msra.mxu0 0
    %189 = vmatprep.subr.bf16.mxu0 0
    %190 = vmatpush1.bf16.msra.mxu0 0
    %191 = vmatprep.subr.bf16.mxu0 0
    %192 = vmatpush1.bf16.msra.mxu0 0
    %193 = vmatprep.subr.bf16.mxu0 0
    %194 = vmatpush1.bf16.msra.mxu0 0
    %195 = vmatprep.subr.bf16.mxu0 0
    %196 = vmatpush1.bf16.msra.mxu0 0
    %197 = vmatprep.subr.bf16.mxu0 0
    %198 = vmatpush1.bf16.msra.mxu0 0
    %199 = vmatprep.subr.bf16.mxu0 0
    %200 = vmatpush1.bf16.msra.mxu0 0
    %201 = vmatprep.mubr.bf16.mxu0 0
    %202 = vmatmul.mubr.bf16.gmra.mrb[0].mxu0 %v161
    %v203 = vpop.f32.mrb[0].mxu0
    %v204 = vadd.f32 %v138, %v203
    %v205 = vpop.f32.mrb[0].mxu0
    %v206 = vadd.f32 %v140, %v205
    %v207 = vpop.f32.mrb[0].mxu0
    %v208 = vpop.f32.mrb[0].mxu0
    %209 = vdwg.mxu0
    %v210 = vld [vmem:[%s4] sm:$0x3]
    %v212 = vlaneseq
    %v213 = vshrl.u32 %v212, 7
    %v214 = vsub.s32 0, %v213
    %v215 = vrot.slane %v210, %v214
    %v216 = vlaneseq
    %v217 = vshrl.u32 %v216, 7
    %v218 = vsub.s32 1, %v217
    %v219 = vrot.slane %v210, %v218
    %v222 = vadd.f32 %v204, %v215
    %v223 = vadd.f32 %v206, %v219
    %v224 = vmax.f32 %v222, 0.0
    %v225 = vmax.f32 %v223, 0.0
    %v226 = vpack.c.bf16 %v224, %v224
    %v227 = vpack.c.bf16 %v225, %v225
    %v228 = vld [vmem:[#allocation8] sm:$0xff]
    %v229 = vld [vmem:[#allocation8 + $0x8] sm:$0xff]
    %v230 = vld [vmem:[#allocation8 + $0x10] sm:$0xff]
    %v231 = vld [vmem:[#allocation8 + $0x18] sm:$0xff]
    %v232 = vld [vmem:[#allocation8 + $0x20] sm:$0xff]
    %v233 = vld [vmem:[#allocation8 + $0x28] sm:$0xff]
    %v234 = vld [vmem:[#allocation8 + $0x30] sm:$0xff]
    %v235 = vld [vmem:[#allocation8 + $0x38] sm:$0xff]
    %v236 = vld [vmem:[#allocation8 + $0x40] sm:$0xff]
    %v237 = vld [vmem:[#allocation8 + $0x48] sm:$0xff]
    %v238 = vld [vmem:[#allocation8 + $0x50] sm:$0xff]
    %v239 = vld [vmem:[#allocation8 + $0x58] sm:$0xff]
    %v240 = vld [vmem:[#allocation8 + $0x60] sm:$0xff]
    %v241 = vld [vmem:[#allocation8 + $0x68] sm:$0xff]
    %v242 = vld [vmem:[#allocation8 + $0x70] sm:$0xff]
    %v243 = vld [vmem:[#allocation8 + $0x78] sm:$0xff]
    %v244 = vld [vmem:[#allocation8 + $0x80] sm:$0xff]
    %v245 = vld [vmem:[#allocation8 + $0x88] sm:$0xff]
    %v246 = vld [vmem:[#allocation8 + $0x90] sm:$0xff]
    %v247 = vld [vmem:[#allocation8 + $0x98] sm:$0xff]
    %v248 = vld [vmem:[#allocation8 + $0xa0] sm:$0xff]
    %v249 = vld [vmem:[#allocation8 + $0xa8] sm:$0xff]
    %v250 = vld [vmem:[#allocation8 + $0xb0] sm:$0xff]
    %v251 = vld [vmem:[#allocation8 + $0xb8] sm:$0xff]
    %v252 = vld [vmem:[#allocation8 + $0xc0] sm:$0xff]
    %v253 = vld [vmem:[#allocation8 + $0xc8] sm:$0xff]
    %v254 = vld [vmem:[#allocation8 + $0xd0] sm:$0xff]
    %v255 = vld [vmem:[#allocation8 + $0xd8] sm:$0xff]
    %v256 = vld [vmem:[#allocation8 + $0xe0] sm:$0xff]
    %v257 = vld [vmem:[#allocation8 + $0xe8] sm:$0xff]
    %v258 = vld [vmem:[#allocation8 + $0xf0] sm:$0xff]
    %v259 = vld [vmem:[#allocation8 + $0xf8] sm:$0xff]
    %v260 = vld [vmem:[%s6] sm:$0x3]
    %v262 = vlaneseq
    %v263 = vshrl.u32 %v262, 7
    %v264 = vsub.s32 0, %v263
    %v265 = vrot.slane %v260, %v264
    %v266 = vlaneseq
    %v267 = vshrl.u32 %v266, 7
    %v268 = vsub.s32 1, %v267
    %v269 = vrot.slane %v260, %v268
    %v304 = vunpack.c.l.b16 %v228
    %v305 = vunpack.c.h.b16 %v228
    %v306 = vunpack.c.l.b16 %v229
    %v307 = vunpack.c.h.b16 %v229
    %v308 = vunpack.c.l.b16 %v230
    %v309 = vunpack.c.h.b16 %v230
    %v310 = vunpack.c.l.b16 %v231
    %v311 = vunpack.c.h.b16 %v231
    %v312 = vunpack.c.l.b16 %v232
    %v313 = vunpack.c.h.b16 %v232
    %v314 = vunpack.c.l.b16 %v233
    %v315 = vunpack.c.h.b16 %v233
    %v316 = vunpack.c.l.b16 %v234
    %v317 = vunpack.c.h.b16 %v234
    %v318 = vunpack.c.l.b16 %v235
    %v319 = vunpack.c.h.b16 %v235
    %v320 = vunpack.c.l.b16 %v236
    %v321 = vunpack.c.h.b16 %v236
    %v322 = vunpack.c.l.b16 %v237
    %v323 = vunpack.c.h.b16 %v237
    %v324 = vunpack.c.l.b16 %v238
    %v325 = vunpack.c.h.b16 %v238
    %v326 = vunpack.c.l.b16 %v239
    %v327 = vunpack.c.h.b16 %v239
    %v328 = vunpack.c.l.b16 %v240
    %v329 = vunpack.c.h.b16 %v240
    %v330 = vunpack.c.l.b16 %v241
    %v331 = vunpack.c.h.b16 %v241
    %v332 = vunpack.c.l.b16 %v242
    %v333 = vunpack.c.h.b16 %v242
    %v334 = vunpack.c.l.b16 %v243
    %v335 = vunpack.c.h.b16 %v243
    %v336 = vunpack.c.l.b16 %v244
    %v337 = vunpack.c.h.b16 %v244
    %v338 = vunpack.c.l.b16 %v245
    %v339 = vunpack.c.h.b16 %v245
    %v340 = vunpack.c.l.b16 %v246
    %v341 = vunpack.c.h.b16 %v246
    %v342 = vunpack.c.l.b16 %v247
    %v343 = vunpack.c.h.b16 %v247
    %v344 = vunpack.c.l.b16 %v248
    %v345 = vunpack.c.h.b16 %v248
    %v346 = vunpack.c.l.b16 %v249
    %v347 = vunpack.c.h.b16 %v249
    %v348 = vunpack.c.l.b16 %v250
    %v349 = vunpack.c.h.b16 %v250
    %v350 = vunpack.c.l.b16 %v251
    %v351 = vunpack.c.h.b16 %v251
    %v352 = vunpack.c.l.b16 %v252
    %v353 = vunpack.c.h.b16 %v252
    %v354 = vunpack.c.l.b16 %v253
    %v355 = vunpack.c.h.b16 %v253
    %v356 = vunpack.c.l.b16 %v254
    %v357 = vunpack.c.h.b16 %v254
    %v358 = vunpack.c.l.b16 %v255
    %v359 = vunpack.c.h.b16 %v255
    %v360 = vunpack.c.l.b16 %v256
    %v361 = vunpack.c.h.b16 %v256
    %v362 = vunpack.c.l.b16 %v257
    %v363 = vunpack.c.h.b16 %v257
    %v364 = vunpack.c.l.b16 %v258
    %v365 = vunpack.c.h.b16 %v258
    %v366 = vunpack.c.l.b16 %v259
    %v367 = vunpack.c.h.b16 %v259
    %v368 = vpack.c.b16 %v306, %v304
    %v369 = vpack.c.b16 %v307, %v305
    %v370 = vpack.c.b16 %v310, %v308
    %v371 = vpack.c.b16 %v311, %v309
    %v372 = vpack.c.b16 %v314, %v312
    %v373 = vpack.c.b16 %v315, %v313
    %v374 = vpack.c.b16 %v318, %v316
    %v375 = vpack.c.b16 %v319, %v317
    %v376 = vpack.c.b16 %v322, %v320
    %v377 = vpack.c.b16 %v323, %v321
    %v378 = vpack.c.b16 %v326, %v324
    %v379 = vpack.c.b16 %v327, %v325
    %v380 = vpack.c.b16 %v330, %v328
    %v381 = vpack.c.b16 %v331, %v329
    %v382 = vpack.c.b16 %v334, %v332
    %v383 = vpack.c.b16 %v335, %v333
    %v384 = vpack.c.b16 %v338, %v336
    %v385 = vpack.c.b16 %v339, %v337
    %v386 = vpack.c.b16 %v342, %v340
    %v387 = vpack.c.b16 %v343, %v341
    %v388 = vpack.c.b16 %v346, %v344
    %v389 = vpack.c.b16 %v347, %v345
    %v390 = vpack.c.b16 %v350, %v348
    %v391 = vpack.c.b16 %v351, %v349
    %v392 = vpack.c.b16 %v354, %v352
    %v393 = vpack.c.b16 %v355, %v353
    %v394 = vpack.c.b16 %v358, %v356
    %v395 = vpack.c.b16 %v359, %v357
    %v396 = vpack.c.b16 %v362, %v360
    %v397 = vpack.c.b16 %v363, %v361
    %v398 = vpack.c.b16 %v366, %v364
    %v399 = vpack.c.b16 %v367, %v365
    %432 = vmatprep.subr.bf16.mxu0 %v369
    %433 = vmatpush1.bf16.msra.mxu0 %v368
    %434 = vmatprep.subr.bf16.mxu0 %v371
    %435 = vmatpush1.bf16.msra.mxu0 %v370
    %436 = vmatprep.subr.bf16.mxu0 %v373
    %437 = vmatpush1.bf16.msra.mxu0 %v372
    %438 = vmatprep.subr.bf16.mxu0 %v375
    %439 = vmatpush1.bf16.msra.mxu0 %v374
    %440 = vmatprep.subr.bf16.mxu0 %v377
    %441 = vmatpush1.bf16.msra.mxu0 %v376
    %442 = vmatprep.subr.bf16.mxu0 %v379
    %443 = vmatpush1.bf16.msra.mxu0 %v378
    %444 = vmatprep.subr.bf16.mxu0 %v381
    %445 = vmatpush1.bf16.msra.mxu0 %v380
    %446 = vmatprep.subr.bf16.mxu0 %v383
    %447 = vmatpush1.bf16.msra.mxu0 %v382
    %448 = vmatprep.subr.bf16.mxu0 %v385
    %449 = vmatpush1.bf16.msra.mxu0 %v384
    %450 = vmatprep.subr.bf16.mxu0 %v387
    %451 = vmatpush1.bf16.msra.mxu0 %v386
    %452 = vmatprep.subr.bf16.mxu0 %v389
    %453 = vmatpush1.bf16.msra.mxu0 %v388
    %454 = vmatprep.subr.bf16.mxu0 %v391
    %455 = vmatpush1.bf16.msra.mxu0 %v390
    %456 = vmatprep.subr.bf16.mxu0 %v393
    %457 = vmatpush1.bf16.msra.mxu0 %v392
    %458 = vmatprep.subr.bf16.mxu0 %v395
    %459 = vmatpush1.bf16.msra.mxu0 %v394
    %460 = vmatprep.subr.bf16.mxu0 %v397
    %461 = vmatpush1.bf16.msra.mxu0 %v396
    %462 = vmatprep.subr.bf16.mxu0 %v399
    %463 = vmatpush1.bf16.msra.mxu0 %v398
    %464 = vmatprep.mubr.bf16.mxu0 %v227
    %465 = vmatmul.mubr.bf16.gmra.mrb[0].mxu0 %v226
    %v466 = vpop.f32.mrb[0].mxu0
    %v467 = vadd.f32 %v265, %v466
    %v468 = vpop.f32.mrb[0].mxu0
    %v469 = vadd.f32 %v269, %v468
    %v470 = vpop.f32.mrb[0].mxu0
    %v471 = vpop.f32.mrb[0].mxu0
    %472 = vdwg.mxu0
    %v473 = vmax.f32 %v467, 0.0
    %v474 = vmax.f32 %v469, 0.0
    %475 = vst [vmem:[#allocation10] sm:$0xff] %v473
    %476 = vst [vmem:[#allocation10 + $0x8] sm:$0xff] %v474
    // Predicated region
    $region46: #{tpu_custom_call.1} parent=1 // pred_check
      _
    $region47: #{tpu_custom_call.1} parent=1 // pred_check_branch
      %478 = sbr.rel (0) target = $region49
    $region48: #{tpu_custom_call.1} parent=1 // pred_region
      %s480 = ssub.s32 256, 256
      %481 = vsyncadd [#allocation4], %s480
      %s483 = sshll.u32 [#allocation10], 4
      %s484 = int_to_ptr.vmem [resolvable:$true] %s483
      %486 = dma.vmem_to_hbm [thread:$0]  %s484, 256, %s7, [#allocation4]
    $region49: #{tpu_custom_call.1} parent=1 // pred_fallthru
      _
    // Predicated region
    $region50: #{tpu_custom_call.1} parent=1 // pred_check
      _
    $region51: #{tpu_custom_call.1} parent=1 // pred_check_branch
      %488 = sbr.rel (0) target = $region53
    $region52: #{tpu_custom_call.1} parent=1 // pred_region
      %489 = dma.done [#allocation4], 256
    $region53: #{tpu_custom_call.1} parent=1 // pred_fallthru
      _
    %490 = vsyncpa [#allocation3], 1
    %491 = vsyncpa [#allocation6], 1
    %492 = vsyncpa [#allocation9], 1
    %493 = vsyncpa [#allocation4], 1

</llo_original>
